<compile_context>
chip_gen: v7x
topology: tpu7x:2x2x1
jax: 0.10.0
libtpu: 0.0.40
codegen_flags: <defaults>
</compile_context>

<pallas_src>
import functools

import numpy as np
import jax
import jax.numpy as jnp
from jax.experimental import pallas as pl
from jax.experimental.pallas import tpu as pltpu


# ----------------------------------------------------------------------------- config
CIN, C1, C2 = 4, 8, 16          # input / conv1 / conv2 channels
H1 = W1 = 16                    # conv1 spatial size
H2 = W2 = 8                     # after pool1
H3 = W3 = 4                     # after pool2
HIDDEN = 32                     # classifier hidden width
EPS = 1e-5                      # BatchNorm eps
HALF = 64                       # half of the 128-lane packed conv-output width


# ----------------------------------------------------------------------------- kernel

def fused_cnn_kernel(xq_ref, m1_ref, b1_ref, m2_ref, b2_ref,
                     v1_ref, bl1_ref, w2_ref, bl2_ref, o_ref, *, bt):
    """Entire CNN forward pass for one batch tile; everything stays in VMEM/vregs."""
    f32, bf16 = jnp.float32, jnp.bfloat16
    R = 4 * bt                                  # rows per row-parity class (m-major, batch-minor)

    def pool_w(a, b):
        # h-pool = max of the two row-parity blocks; w-pool = max of the two 64-lane
        # halves (width-parity-major output lane layout).
        m = jnp.maximum(a, b)
        return jnp.maximum(m[:, :HALF], m[:, HALF:])

    # ---- conv1 (+ folded eval-BN) + bias + ReLU: ONE K=192 matmul over all 4 classes ----
    # xq rows: c*R + m*bt + n  <->  output row h1 = 4m + c;  lanes: kh*64 + w_in*CIN + ci
    xq = xq_ref[...]                                                     # (4R, 192) bf16
    c1 = jnp.dot(xq, m1_ref[...], preferred_element_type=f32) + b1_ref[...]
    c1 = jnp.maximum(c1, 0.0)                                            # (4R, 128) f32

    # ---- fused maxpool1; hoisted bf16 casts (pooled rows ho = 2m + s, lanes wo*C1 + c1) ----
    p1_0 = pool_w(c1[0 * R:1 * R], c1[1 * R:2 * R]).astype(bf16)         # s = 0 -> ho even
    p1_1 = pool_w(c1[2 * R:3 * R], c1[3 * R:4 * R]).astype(bf16)         # s = 1 -> ho odd

    # ---- conv2 tap blocks (rows h3*bt + n), O(1) shift construction ----
    zb = jnp.zeros((bt, HALF), bf16)
    blk0 = jnp.concatenate([zb, p1_1[:3 * bt]], axis=0)                  # pooled row 2h3 - 1
    blk3 = jnp.concatenate([p1_0[bt:], zb], axis=0)                      # pooled row 2h3 + 2

    # ---- conv2 (+ folded BN) + bias + ReLU: ONE K=192 matmul over both row parities ----
    a2 = jnp.concatenate(
        [jnp.concatenate([blk0, p1_0, p1_1], axis=1),                    # parity p = 0 taps
         jnp.concatenate([p1_0, p1_1, blk3], axis=1)],                   # parity p = 1 taps
        axis=0)                                                          # (2R, 192) bf16
    c2 = jnp.dot(a2, m2_ref[...], preferred_element_type=f32) + b2_ref[...]
    c2 = jnp.maximum(c2, 0.0)                                            # (2R, 128) f32

    # ---- fused maxpool2: rows h3*bt + n, lanes w3*C2 + c2 ----
    p2 = pool_w(c2[:R], c2[R:])                                          # (R, 64) f32

    # ---- classifier: Flatten -> Linear(256,32) -> ReLU -> Dropout(eval: id) -> Linear(32,10)
    xfc = jnp.concatenate([p2[h3 * bt:(h3 + 1) * bt] for h3 in range(4)],
                          axis=1).astype(bf16)                           # (bt, 256)
    hid = jnp.maximum(jnp.dot(xfc, v1_ref[...], preferred_element_type=f32)
                      + bl1_ref[...], 0.0)                               # (bt, 128) f32
    o_ref[...] = (jnp.dot(hid.astype(bf16), w2_ref[...], preferred_element_type=f32)
                  + bl2_ref[...])                                        # (bt, 128)


# ----------------------------------------------------------------------------- host glue

def prep_input(x_nchw, bt):
    """NCHW -> zero-H-padded, lane-dense conv1 operand.

    Row  = tile*16*bt + c*4*bt + m*bt + n_local   (c = h1 mod 4, m = h1 // 4)
    Lane = kh*64 + w*CIN + ci  with content x_pad[n, ci, 4m + c + kh, w].
    Pure layout plumbing (runs inside the jit), ~1.5x the raw input bytes.
    """
    n = x_nchw.shape[0]
    nt = n // bt
    xl = jnp.transpose(x_nchw, (0, 2, 3, 1)).reshape(n, H1, W1 * CIN)    # lanes = w*CIN + ci
    xpad = jnp.pad(xl, ((0, 0), (1, 1), (0, 0)))                         # (n, 18, 64)
    qblk = [xpad[:, q:q + 13:4, :] for q in range(6)]                    # q -> rows 4m + q
    per_cls = jnp.stack(
        [jnp.concatenate([qblk[c], qblk[c + 1], qblk[c + 2]], axis=-1) for c in range(4)],
        axis=0)                                                          # (4, n, 4, 192)
    per_cls = per_cls.reshape(4, nt, bt, 4, 3 * W1 * CIN)
    per_cls = jnp.transpose(per_cls, (1, 0, 3, 2, 4))                    # (tile, c, m, n_local, 192)
    return per_cls.reshape(nt * 16 * bt, 3 * W1 * CIN).astype(jnp.bfloat16)


@functools.partial(jax.jit, static_argnames=("classes_num",))
def cnn_forward(x_nchw, params, *, classes_num):
    n = x_nchw.shape[0]
    bt = 8 if n % 8 == 0 else n          # batch tile (grid axis is 'parallel' -> v7x 2 TCs)
    nt = n // bt
    xq = prep_input(x_nchw.astype(jnp.float32), bt)

    grid_spec = pltpu.PrefetchScalarGridSpec(
        num_scalar_prefetch=0,
        grid=(nt,),
        in_specs=[
            pl.BlockSpec((16 * bt, 192), lambda i: (i, 0)),   # conv1 operand, streamed per tile
            pl.BlockSpec((192, 128), lambda i: (0, 0)),       # M1 (K-merged)
            pl.BlockSpec((1, 128), lambda i: (0, 0)),         # b1
            pl.BlockSpec((192, 128), lambda i: (0, 0)),       # M2 (K-merged)
            pl.BlockSpec((1, 128), lambda i: (0, 0)),         # b2
            pl.BlockSpec((256, 128), lambda i: (0, 0)),       # fc1 (N padded to 128)
            pl.BlockSpec((1, 128), lambda i: (0, 0)),         # fc1 bias (padded)
            pl.BlockSpec((128, 128), lambda i: (0, 0)),       # fc2 (K and N padded to 128)
            pl.BlockSpec((1, 128), lambda i: (0, 0)),         # fc2 bias (padded)
        ],
        out_specs=pl.BlockSpec((bt, 128), lambda i: (i, 0)),
    )
    logits_pad = pl.pallas_call(
        functools.partial(fused_cnn_kernel, bt=bt),
        out_shape=jax.ShapeDtypeStruct((n, 128), jnp.float32),
        grid_spec=grid_spec,
        compiler_params=pltpu.CompilerParams(
            dimension_semantics=("parallel",),
            vmem_limit_bytes=32 * 1024 * 1024),
    )(xq, params['M1'], params['b1v'], params['M2'], params['b2v'],
      params['V1'], params['bl1'], params['W2p'], params['bl2p'])
    return logits_pad[:, :classes_num]


# ----------------------------------------------------------------------------- params

def init_params(key, in_channels=CIN, classes_num=10):
    assert in_channels == CIN
    ks = jax.random.split(key, 4)
    bn_scale = 1.0 / np.sqrt(1.0 + EPS)   # eval-mode BN with fresh stats: gamma=1, mean=0, var=1
    # TODO(synk): for a trained checkpoint, fold the real (gamma, beta, mean, var) into w/b here.

    # Base weights in the PyTorch layouts (zero_bias init for conv/linear biases).
    w_conv1 = np.asarray(jax.random.normal(ks[0], (C1, CIN, 3, 3), jnp.float32)) * 0.1
    w_conv2 = np.asarray(jax.random.normal(ks[1], (C2, C1, 3, 3), jnp.float32)) * 0.1
    w_fc1 = np.asarray(jax.random.normal(ks[2], (HIDDEN, C2 * H3 * W3), jnp.float32)) * 0.05
    w_fc2 = np.asarray(jax.random.normal(ks[3], (classes_num, HIDDEN), jnp.float32)) * 0.05
    b_conv1 = np.zeros((C1,), np.float32)
    b_conv2 = np.zeros((C2,), np.float32)
    b_fc1 = np.zeros((HIDDEN,), np.float32)
    b_fc2 = np.zeros((classes_num,), np.float32)

    # Fold eval-mode BatchNorm into the conv weights / biases.
    w1f, b1f = w_conv1 * bn_scale, b_conv1 * bn_scale
    w2f, b2f = w_conv2 * bn_scale, b_conv2 * bn_scale

    # conv1 banded matrix, K = kh*64 + w_in*CIN + ci, N = (w%2)*64 + (w//2)*C1 + co
    M1 = np.zeros((3, W1 * CIN, 128), np.float32)
    b1v = np.zeros((1, 128), np.float32)
    for w in range(W1):
        col = (w % 2) * HALF + (w // 2) * C1
        b1v[0, col:col + C1] = b1f
        for kh in range(3):
            for kw in range(3):
                win = w + kw - 1
                if 0 <= win < W1:
                    M1[kh, win * CIN:(win + 1) * CIN, col:col + C1] = w1f[:, :, kh, kw].T
    M1 = M1.reshape(3 * W1 * CIN, 128)

    # conv2 banded matrix, K = kh*64 + w_in*C1 + c1, N = (w%2)*64 + (w//2)*C2 + c2
    M2 = np.zeros((3, W2 * C1, 128), np.float32)
    b2v = np.zeros((1, 128), np.float32)
    for w in range(W2):
        col = (w % 2) * HALF + (w // 2) * C2
        b2v[0, col:col + C2] = b2f
        for kh in range(3):
            for kw in range(3):
                win = w + kw - 1
                if 0 <= win < W2:
                    M2[kh, win * C1:(win + 1) * C1, col:col + C2] = w2f[:, :, kh, kw].T
    M2 = M2.reshape(3 * W2 * C1, 128)

    # fc1: K = h3*64 + w3*C2 + c2  <->  torch column c2*16 + h3*4 + w3; N padded to 128 lanes
    V1 = np.zeros((H3, W3 * C2, HIDDEN), np.float32)
    for h3 in range(H3):
        for w3 in range(W3):
            for c2 in range(C2):
                V1[h3, w3 * C2 + c2, :] = w_fc1[:, c2 * (H3 * W3) + h3 * W3 + w3]
    V1p = np.zeros((H3 * W3 * C2, 128), np.float32)
    V1p[:, :HIDDEN] = V1.reshape(H3 * W3 * C2, HIDDEN)
    bl1p = np.zeros((1, 128), np.float32)
    bl1p[0, :HIDDEN] = b_fc1

    # fc2: K padded to 128 (hidden lanes >= 32 are zero), N padded to 128 (unmasked store)
    W2p = np.zeros((128, 128), np.float32)
    W2p[:HIDDEN, :classes_num] = w_fc2.T
    bl2p = np.zeros((1, 128), np.float32)
    bl2p[0, :classes_num] = b_fc2

    params = {
        'M1': jnp.asarray(M1, jnp.bfloat16),
        'b1v': jnp.asarray(b1v),
        'M2': jnp.asarray(M2, jnp.bfloat16),
        'b2v': jnp.asarray(b2v),
        'V1': jnp.asarray(V1p, jnp.bfloat16),
        'bl1': jnp.asarray(bl1p),
        'W2p': jnp.asarray(W2p, jnp.bfloat16),
        'bl2p': jnp.asarray(bl2p),
    }
    ref_weights = {'w_conv1': w_conv1, 'b_conv1': b_conv1,
                   'w_conv2': w_conv2, 'b_conv2': b_conv2,
                   'w_fc1': w_fc1, 'b_fc1': b_fc1,
                   'w_fc2': w_fc2, 'b_fc2': b_fc2}
    return params, ref_weights


# ----------------------------------------------------------------------------- reference

def reference_forward(x_nchw, ref):
    """Pure-JAX f32 reference of the same module (eval mode)."""
    x = x_nchw.astype(jnp.float32)
    bn = 1.0 / np.sqrt(1.0 + EPS)

    def conv3x3(t, w, b):                        # NCHW input, OIHW weight, pad=1
        n, c, h, wd = t.shape
        tp = jnp.pad(t, ((0, 0), (0, 0), (1, 1), (1, 1)))
        out = jnp.zeros((n, w.shape[0], h, wd), jnp.float32)
        for kh in range(3):
            for kw in range(3):
                out = out + jnp.einsum('nchw,oc->nohw',
                                       tp[:, :, kh:kh + h, kw:kw + wd], w[:, :, kh, kw])
        return out + b[None, :, None, None]

    def pool2(t):
        n, c, h, wd = t.shape
        return jnp.max(t.reshape(n, c, h // 2, 2, wd // 2, 2), axis=(3, 5))

    y = jnp.maximum(conv3x3(x, jnp.asarray(ref['w_conv1']), jnp.asarray(ref['b_conv1'])) * bn, 0.0)
    y = pool2(y)
    y = jnp.maximum(conv3x3(y, jnp.asarray(ref['w_conv2']), jnp.asarray(ref['b_conv2'])) * bn, 0.0)
    y = pool2(y)
    flat = y.reshape(y.shape[0], -1)
    h = jnp.maximum(flat @ jnp.asarray(ref['w_fc1']).T + jnp.asarray(ref['b_fc1']), 0.0)
    return h @ jnp.asarray(ref['w_fc2']).T + jnp.asarray(ref['b_fc2'])


# ----------------------------------------------------------------------------- main

if __name__ == "__main__":
    key = jax.random.PRNGKey(0)
    k_in, k_par = jax.random.split(key)

    x = jax.random.normal(k_in, (2, CIN, H1, W1), jnp.float32)   # (batch, channels, H, W)
    params, ref_weights = init_params(k_par, in_channels=CIN, classes_num=10)

    logits = jax.block_until_ready(cnn_forward(x, params, classes_num=10))
    assert logits.shape == (2, 10), logits.shape
    assert bool(jnp.all(jnp.isfinite(logits)))

    # Pure-JAX f32 reference check (kernel uses bf16 matmul operands -> loose tolerance).
    ref = jax.block_until_ready(reference_forward(x, ref_weights))
    max_err = float(jnp.max(jnp.abs(logits - ref)))
    assert max_err < 2e-2 + 2e-2 * float(jnp.max(jnp.abs(ref))), max_err

    print("KERNEL_OK")
</pallas_src>

<mosaic_0001>
module attributes {stable_mosaic.version = 11 : i64} {
  func.func @fused_cnn_kernel(%arg0: i32, %arg1: memref<32x192xbf16, #tpu.memory_space<vmem>>, %arg2: memref<192x128xbf16, #tpu.memory_space<vmem>>, %arg3: memref<1x128xf32, #tpu.memory_space<vmem>>, %arg4: memref<192x128xbf16, #tpu.memory_space<vmem>>, %arg5: memref<1x128xf32, #tpu.memory_space<vmem>>, %arg6: memref<256x128xbf16, #tpu.memory_space<vmem>>, %arg7: memref<1x128xf32, #tpu.memory_space<vmem>>, %arg8: memref<128x128xbf16, #tpu.memory_space<vmem>>, %arg9: memref<1x128xf32, #tpu.memory_space<vmem>>, %arg10: memref<2x128xf32, #tpu.memory_space<vmem>>) attributes {dimension_semantics = [#tpu.dimension_semantics<parallel>], iteration_bounds = array<i64: 1>, scalar_prefetch = 0 : i64, scratch_operands = 0 : i64, tpu.core_type = #tpu.core_type<tc>, window_params = [{transform_indices = @transform_0, window_bounds = array<i64: 32, 192>}, {pipeline_mode = #tpu.pipeline_mode<synchronous>, transform_indices = @transform_1, window_bounds = array<i64: 192, 128>}, {pipeline_mode = #tpu.pipeline_mode<synchronous>, transform_indices = @transform_2, window_bounds = array<i64: 1, 128>}, {pipeline_mode = #tpu.pipeline_mode<synchronous>, transform_indices = @transform_3, window_bounds = array<i64: 192, 128>}, {pipeline_mode = #tpu.pipeline_mode<synchronous>, transform_indices = @transform_4, window_bounds = array<i64: 1, 128>}, {pipeline_mode = #tpu.pipeline_mode<synchronous>, transform_indices = @transform_5, window_bounds = array<i64: 256, 128>}, {pipeline_mode = #tpu.pipeline_mode<synchronous>, transform_indices = @transform_6, window_bounds = array<i64: 1, 128>}, {pipeline_mode = #tpu.pipeline_mode<synchronous>, transform_indices = @transform_7, window_bounds = array<i64: 128, 128>}, {pipeline_mode = #tpu.pipeline_mode<synchronous>, transform_indices = @transform_8, window_bounds = array<i64: 1, 128>}, {transform_indices = @transform_9, window_bounds = array<i64: 2, 128>}]} {
    %c0 = arith.constant 0 : index
    %c0_0 = arith.constant 0 : index
    %0 = vector.load %arg1[%c0, %c0_0] : memref<32x192xbf16, #tpu.memory_space<vmem>>, vector<32x192xbf16>
    %c0_1 = arith.constant 0 : index
    %c0_2 = arith.constant 0 : index
    %1 = vector.load %arg2[%c0_1, %c0_2] : memref<192x128xbf16, #tpu.memory_space<vmem>>, vector<192x128xbf16>
    %cst = arith.constant dense<0.000000e+00> : vector<32x128xf32>
    %2 = tpu.matmul %0, %1, %cst {dimension_numbers = #tpu.dot_dimension_numbers<[1], [0], [0], [1], [0, 0, 1, 1], [], []>} : vector<32x192xbf16>, vector<192x128xbf16>, vector<32x128xf32> -> vector<32x128xf32>
    %c0_3 = arith.constant 0 : index
    %c0_4 = arith.constant 0 : index
    %3 = vector.load %arg3[%c0_3, %c0_4] : memref<1x128xf32, #tpu.memory_space<vmem>>, vector<1x128xf32>
    %4 = vector.broadcast %3 : vector<1x128xf32> to vector<32x128xf32>
    %5 = arith.addf %2, %4 : vector<32x128xf32>
    %cst_5 = arith.constant 0.000000e+00 : f32
    %6 = vector.broadcast %cst_5 : f32 to vector<32x128xf32>
    %7 = arith.maximumf %5, %6 : vector<32x128xf32>
    %8 = vector.extract_strided_slice %7 {offsets = [0, 0], sizes = [8, 128], strides = [1, 1]} : vector<32x128xf32> to vector<8x128xf32>
    %9 = vector.extract_strided_slice %7 {offsets = [8, 0], sizes = [8, 128], strides = [1, 1]} : vector<32x128xf32> to vector<8x128xf32>
    %10 = arith.maximumf %8, %9 : vector<8x128xf32>
    %11 = vector.extract_strided_slice %10 {offsets = [0, 0], sizes = [8, 64], strides = [1, 1]} : vector<8x128xf32> to vector<8x64xf32>
    %12 = vector.extract_strided_slice %10 {offsets = [0, 64], sizes = [8, 64], strides = [1, 1]} : vector<8x128xf32> to vector<8x64xf32>
    %13 = arith.maximumf %11, %12 : vector<8x64xf32>
    %14 = arith.truncf %13 : vector<8x64xf32> to vector<8x64xbf16>
    %15 = vector.extract_strided_slice %7 {offsets = [16, 0], sizes = [8, 128], strides = [1, 1]} : vector<32x128xf32> to vector<8x128xf32>
    %16 = vector.extract_strided_slice %7 {offsets = [24, 0], sizes = [8, 128], strides = [1, 1]} : vector<32x128xf32> to vector<8x128xf32>
    %17 = arith.maximumf %15, %16 : vector<8x128xf32>
    %18 = vector.extract_strided_slice %17 {offsets = [0, 0], sizes = [8, 64], strides = [1, 1]} : vector<8x128xf32> to vector<8x64xf32>
    %19 = vector.extract_strided_slice %17 {offsets = [0, 64], sizes = [8, 64], strides = [1, 1]} : vector<8x128xf32> to vector<8x64xf32>
    %20 = arith.maximumf %18, %19 : vector<8x64xf32>
    %21 = arith.truncf %20 : vector<8x64xf32> to vector<8x64xbf16>
    %cst_6 = arith.constant 0.000000e+00 : bf16
    %22 = vector.broadcast %cst_6 : bf16 to vector<2x64xbf16>
    %23 = vector.extract_strided_slice %21 {offsets = [0, 0], sizes = [6, 64], strides = [1, 1]} : vector<8x64xbf16> to vector<6x64xbf16>
    %24 = tpu.concatenate %22, %23 in 0 : vector<2x64xbf16>, vector<6x64xbf16> -> vector<8x64xbf16>
    %25 = vector.extract_strided_slice %14 {offsets = [2, 0], sizes = [6, 64], strides = [1, 1]} : vector<8x64xbf16> to vector<6x64xbf16>
    %26 = tpu.concatenate %25, %22 in 0 : vector<6x64xbf16>, vector<2x64xbf16> -> vector<8x64xbf16>
    %27 = tpu.concatenate %24, %14, %21 in 1 : vector<8x64xbf16>, vector<8x64xbf16>, vector<8x64xbf16> -> vector<8x192xbf16>
    %28 = tpu.concatenate %14, %21, %26 in 1 : vector<8x64xbf16>, vector<8x64xbf16>, vector<8x64xbf16> -> vector<8x192xbf16>
    %29 = tpu.concatenate %27, %28 in 0 : vector<8x192xbf16>, vector<8x192xbf16> -> vector<16x192xbf16>
    %c0_7 = arith.constant 0 : index
    %c0_8 = arith.constant 0 : index
    %30 = vector.load %arg4[%c0_7, %c0_8] : memref<192x128xbf16, #tpu.memory_space<vmem>>, vector<192x128xbf16>
    %cst_9 = arith.constant dense<0.000000e+00> : vector<16x128xf32>
    %31 = tpu.matmul %29, %30, %cst_9 {dimension_numbers = #tpu.dot_dimension_numbers<[1], [0], [0], [1], [0, 0, 1, 1], [], []>} : vector<16x192xbf16>, vector<192x128xbf16>, vector<16x128xf32> -> vector<16x128xf32>
    %c0_10 = arith.constant 0 : index
    %c0_11 = arith.constant 0 : index
    %32 = vector.load %arg5[%c0_10, %c0_11] : memref<1x128xf32, #tpu.memory_space<vmem>>, vector<1x128xf32>
    %33 = vector.broadcast %32 : vector<1x128xf32> to vector<16x128xf32>
    %34 = arith.addf %31, %33 : vector<16x128xf32>
    %cst_12 = arith.constant 0.000000e+00 : f32
    %35 = vector.broadcast %cst_12 : f32 to vector<16x128xf32>
    %36 = arith.maximumf %34, %35 : vector<16x128xf32>
    %37 = vector.extract_strided_slice %36 {offsets = [0, 0], sizes = [8, 128], strides = [1, 1]} : vector<16x128xf32> to vector<8x128xf32>
    %38 = vector.extract_strided_slice %36 {offsets = [8, 0], sizes = [8, 128], strides = [1, 1]} : vector<16x128xf32> to vector<8x128xf32>
    %39 = arith.maximumf %37, %38 : vector<8x128xf32>
    %40 = vector.extract_strided_slice %39 {offsets = [0, 0], sizes = [8, 64], strides = [1, 1]} : vector<8x128xf32> to vector<8x64xf32>
    %41 = vector.extract_strided_slice %39 {offsets = [0, 64], sizes = [8, 64], strides = [1, 1]} : vector<8x128xf32> to vector<8x64xf32>
    %42 = arith.maximumf %40, %41 : vector<8x64xf32>
    %43 = vector.extract_strided_slice %42 {offsets = [0, 0], sizes = [2, 64], strides = [1, 1]} : vector<8x64xf32> to vector<2x64xf32>
    %44 = vector.extract_strided_slice %42 {offsets = [2, 0], sizes = [2, 64], strides = [1, 1]} : vector<8x64xf32> to vector<2x64xf32>
    %45 = vector.extract_strided_slice %42 {offsets = [4, 0], sizes = [2, 64], strides = [1, 1]} : vector<8x64xf32> to vector<2x64xf32>
    %46 = vector.extract_strided_slice %42 {offsets = [6, 0], sizes = [2, 64], strides = [1, 1]} : vector<8x64xf32> to vector<2x64xf32>
    %47 = tpu.concatenate %43, %44, %45, %46 in 1 : vector<2x64xf32>, vector<2x64xf32>, vector<2x64xf32>, vector<2x64xf32> -> vector<2x256xf32>
    %48 = arith.truncf %47 : vector<2x256xf32> to vector<2x256xbf16>
    %c0_13 = arith.constant 0 : index
    %c0_14 = arith.constant 0 : index
    %49 = vector.load %arg6[%c0_13, %c0_14] : memref<256x128xbf16, #tpu.memory_space<vmem>>, vector<256x128xbf16>
    %cst_15 = arith.constant dense<0.000000e+00> : vector<2x128xf32>
    %50 = tpu.matmul %48, %49, %cst_15 {dimension_numbers = #tpu.dot_dimension_numbers<[1], [0], [0], [1], [0, 0, 1, 1], [], []>} : vector<2x256xbf16>, vector<256x128xbf16>, vector<2x128xf32> -> vector<2x128xf32>
    %c0_16 = arith.constant 0 : index
    %c0_17 = arith.constant 0 : index
    %51 = vector.load %arg7[%c0_16, %c0_17] : memref<1x128xf32, #tpu.memory_space<vmem>>, vector<1x128xf32>
    %52 = vector.broadcast %51 : vector<1x128xf32> to vector<2x128xf32>
    %53 = arith.addf %50, %52 : vector<2x128xf32>
    %cst_18 = arith.constant 0.000000e+00 : f32
    %54 = vector.broadcast %cst_18 : f32 to vector<2x128xf32>
    %55 = arith.maximumf %53, %54 : vector<2x128xf32>
    %56 = arith.truncf %55 : vector<2x128xf32> to vector<2x128xbf16>
    %c0_19 = arith.constant 0 : index
    %c0_20 = arith.constant 0 : index
    %57 = vector.load %arg8[%c0_19, %c0_20] : memref<128x128xbf16, #tpu.memory_space<vmem>>, vector<128x128xbf16>
    %cst_21 = arith.constant dense<0.000000e+00> : vector<2x128xf32>
    %58 = tpu.matmul %56, %57, %cst_21 {dimension_numbers = #tpu.dot_dimension_numbers<[1], [0], [0], [1], [0, 0, 1, 1], [], []>} : vector<2x128xbf16>, vector<128x128xbf16>, vector<2x128xf32> -> vector<2x128xf32>
    %c0_22 = arith.constant 0 : index
    %c0_23 = arith.constant 0 : index
    %59 = vector.load %arg9[%c0_22, %c0_23] : memref<1x128xf32, #tpu.memory_space<vmem>>, vector<1x128xf32>
    %60 = vector.broadcast %59 : vector<1x128xf32> to vector<2x128xf32>
    %61 = arith.addf %58, %60 : vector<2x128xf32>
    %c0_24 = arith.constant 0 : index
    %c0_25 = arith.constant 0 : index
    %62 = vector.load %arg10[%c0_24, %c0_25] : memref<2x128xf32, #tpu.memory_space<vmem>>, vector<2x128xf32>
    tpu.vector_store %arg10[%c0_24, %c0_25], %61 {strides = array<i32>} : memref<2x128xf32, #tpu.memory_space<vmem>>, vector<2x128xf32>,
    return
  }
  func.func @transform_0(%arg0: i32) -> (i32, i32) {
    %c0_i32 = arith.constant 0 : i32
    %c0_i32_0 = arith.constant 0 : i32
    return %arg0, %c0_i32 : i32, i32
  }
  func.func @transform_1(%arg0: i32) -> (i32, i32) {
    %c0_i32 = arith.constant 0 : i32
    %c0_i32_0 = arith.constant 0 : i32
    %c0_i32_1 = arith.constant 0 : i32
    return %c0_i32, %c0_i32_0 : i32, i32
  }
  func.func @transform_2(%arg0: i32) -> (i32, i32) {
    %c0_i32 = arith.constant 0 : i32
    %c0_i32_0 = arith.constant 0 : i32
    %c0_i32_1 = arith.constant 0 : i32
    return %c0_i32, %c0_i32_0 : i32, i32
  }
  func.func @transform_3(%arg0: i32) -> (i32, i32) {
    %c0_i32 = arith.constant 0 : i32
    %c0_i32_0 = arith.constant 0 : i32
    %c0_i32_1 = arith.constant 0 : i32
    return %c0_i32, %c0_i32_0 : i32, i32
  }
  func.func @transform_4(%arg0: i32) -> (i32, i32) {
    %c0_i32 = arith.constant 0 : i32
    %c0_i32_0 = arith.constant 0 : i32
    %c0_i32_1 = arith.constant 0 : i32
    return %c0_i32, %c0_i32_0 : i32, i32
  }
  func.func @transform_5(%arg0: i32) -> (i32, i32) {
    %c0_i32 = arith.constant 0 : i32
    %c0_i32_0 = arith.constant 0 : i32
    %c0_i32_1 = arith.constant 0 : i32
    return %c0_i32, %c0_i32_0 : i32, i32
  }
  func.func @transform_6(%arg0: i32) -> (i32, i32) {
    %c0_i32 = arith.constant 0 : i32
    %c0_i32_0 = arith.constant 0 : i32
    %c0_i32_1 = arith.constant 0 : i32
    return %c0_i32, %c0_i32_0 : i32, i32
  }
  func.func @transform_7(%arg0: i32) -> (i32, i32) {
    %c0_i32 = arith.constant 0 : i32
    %c0_i32_0 = arith.constant 0 : i32
    %c0_i32_1 = arith.constant 0 : i32
    return %c0_i32, %c0_i32_0 : i32, i32
  }
  func.func @transform_8(%arg0: i32) -> (i32, i32) {
    %c0_i32 = arith.constant 0 : i32
    %c0_i32_0 = arith.constant 0 : i32
    %c0_i32_1 = arith.constant 0 : i32
    return %c0_i32, %c0_i32_0 : i32, i32
  }
  func.func @transform_9(%arg0: i32) -> (i32, i32) {
    %c0_i32 = arith.constant 0 : i32
    %c0_i32_0 = arith.constant 0 : i32
    return %arg0, %c0_i32 : i32, i32
  }
}

</mosaic_0001>

<llo_original>
// kernel: cnn_forward.1
$region0: #{cnn_forward.1}
  #allocation0 [shape = 'u32[]', space=smem, size = 0x4, offset = 0x4, fixed_abs, tag = 'smem constant byte address 0x4 - core index']
  #allocation1 [shape = 'u32[144,128]{1,0:T(1,128)}', space=vmem, size = 0x12000, scoped, tag = 'internal scratch']
  %s0 = inlined_call_operand.vmem [shape: bf16[32,192], index: 0, kind: input, shape index: {}]
  %s1 = inlined_call_operand.vmem [shape: bf16[192,128], index: 1, kind: input, shape index: {}]
  %s2 = inlined_call_operand.vmem [shape: f32[1,128], index: 2, kind: input, shape index: {}]
  %s3 = inlined_call_operand.vmem [shape: bf16[192,128], index: 3, kind: input, shape index: {}]
  %s4 = inlined_call_operand.vmem [shape: f32[1,128], index: 4, kind: input, shape index: {}]
  %s5 = inlined_call_operand.vmem [shape: bf16[256,128], index: 5, kind: input, shape index: {}]
  %s6 = inlined_call_operand.vmem [shape: f32[1,128], index: 6, kind: input, shape index: {}]
  %s7 = inlined_call_operand.vmem [shape: bf16[128,128], index: 7, kind: input, shape index: {}]
  %s8 = inlined_call_operand.vmem [shape: f32[1,128], index: 8, kind: input, shape index: {}]
  %s9 = inlined_call_operand.hbm [shape: f32[2,128], index: 9, kind: output, shape index: {}]
  %s10 = sld [smem:[#allocation0]]
  $region46: #{cnn_forward.1} parent=0
    _
  %s12 = ssub.s32 1, %s10
  %s13 = scalar_select 0, %s12, %s10
  $region1: #{cnn_forward.1} parent=0
    #allocation2 [shape = 'u8[1024]{0}', space=vmem, size = 0x400, scoped, tag = 'output window, operand 0, single buffered']
    #allocation3 [shape = 's32[1]{0}', space=sflag, size = 0x4, scoped, tag = 'scoped memory for cnn_forward.1']
    %14 = vsyncpa [#allocation3], 0
    // Predicated region
    $region2: #{cnn_forward.1} parent=1 // pred_check
      _
    $region3: #{cnn_forward.1} parent=1 // pred_check_branch
      %16 = sbr.rel (0) target = $region5
    $region4: #{cnn_forward.1} parent=1 // pred_region
      _
    $region5: #{cnn_forward.1} parent=1 // pred_fallthru
      _
    // Predicated region
    $region6: #{cnn_forward.1} parent=1 // pred_check
      _
    $region7: #{cnn_forward.1} parent=1 // pred_check_branch
      %18 = sbr.rel (0) target = $region9
    $region8: #{cnn_forward.1} parent=1 // pred_region
      _
    $region9: #{cnn_forward.1} parent=1 // pred_fallthru
      _
    // Predicated region
    $region10: #{cnn_forward.1} parent=1 // pred_check
      _
    $region11: #{cnn_forward.1} parent=1 // pred_check_branch
      %20 = sbr.rel (0) target = $region13
    $region12: #{cnn_forward.1} parent=1 // pred_region
      _
    $region13: #{cnn_forward.1} parent=1 // pred_fallthru
      _
    // Predicated region
    $region14: #{cnn_forward.1} parent=1 // pred_check
      _
    $region15: #{cnn_forward.1} parent=1 // pred_check_branch
      %22 = sbr.rel (0) target = $region17
    $region16: #{cnn_forward.1} parent=1 // pred_region
      _
    $region17: #{cnn_forward.1} parent=1 // pred_fallthru
      _
    // Predicated region
    $region18: #{cnn_forward.1} parent=1 // pred_check
      _
    $region19: #{cnn_forward.1} parent=1 // pred_check_branch
      %24 = sbr.rel (0) target = $region21
    $region20: #{cnn_forward.1} parent=1 // pred_region
      _
    $region21: #{cnn_forward.1} parent=1 // pred_fallthru
      _
    // Predicated region
    $region22: #{cnn_forward.1} parent=1 // pred_check
      _
    $region23: #{cnn_forward.1} parent=1 // pred_check_branch
      %26 = sbr.rel (0) target = $region25
    $region24: #{cnn_forward.1} parent=1 // pred_region
      _
    $region25: #{cnn_forward.1} parent=1 // pred_fallthru
      _
    // Predicated region
    $region26: #{cnn_forward.1} parent=1 // pred_check
      _
    $region27: #{cnn_forward.1} parent=1 // pred_check_branch
      %28 = sbr.rel (0) target = $region29
    $region28: #{cnn_forward.1} parent=1 // pred_region
      _
    $region29: #{cnn_forward.1} parent=1 // pred_fallthru
      _
    // Predicated region
    $region30: #{cnn_forward.1} parent=1 // pred_check
      _
    $region31: #{cnn_forward.1} parent=1 // pred_check_branch
      %30 = sbr.rel (0) target = $region33
    $region32: #{cnn_forward.1} parent=1 // pred_region
      _
    $region33: #{cnn_forward.1} parent=1 // pred_fallthru
      _
    // Predicated region
    $region34: #{cnn_forward.1} parent=1 // pred_check
      _
    $region35: #{cnn_forward.1} parent=1 // pred_check_branch
      %32 = sbr.rel (0) target = $region37
    $region36: #{cnn_forward.1} parent=1 // pred_region
      _
    $region37: #{cnn_forward.1} parent=1 // pred_fallthru
      _
    %v34 = vld [vmem:[%s0] sm:$0xff]
    %v35 = vld [vmem:[%s0 + $0x8] sm:$0xff]
    %v36 = vld [vmem:[%s0 + $0x10] sm:$0xff]
    %v37 = vld [vmem:[%s0 + $0x18] sm:$0xff]
    %v38 = vld [vmem:[%s1] sm:$0xf]
    %v39 = vld [vmem:[%s1 + $0x4] sm:$0xf]
    %v40 = vld [vmem:[%s1 + $0x8] sm:$0xf]
    %v41 = vld [vmem:[%s1 + $0xc] sm:$0xf]
    %v42 = vld [vmem:[%s1 + $0x10] sm:$0xf]
    %v43 = vld [vmem:[%s1 + $0x14] sm:$0xf]
    %v44 = vld [vmem:[%s1 + $0x18] sm:$0xf]
    %v45 = vld [vmem:[%s1 + $0x1c] sm:$0xf]
    %v46 = vld [vmem:[%s1 + $0x20] sm:$0xf]
    %v47 = vld [vmem:[%s1 + $0x24] sm:$0xf]
    %v48 = vld [vmem:[%s1 + $0x28] sm:$0xf]
    %v49 = vld [vmem:[%s1 + $0x2c] sm:$0xf]
    %v50 = vld [vmem:[%s1 + $0x30] sm:$0xf]
    %v51 = vld [vmem:[%s1 + $0x34] sm:$0xf]
    %v52 = vld [vmem:[%s1 + $0x38] sm:$0xf]
    %v53 = vld [vmem:[%s1 + $0x3c] sm:$0xf]
    %v54 = vld [vmem:[%s1 + $0x40] sm:$0xf]
    %v55 = vld [vmem:[%s1 + $0x44] sm:$0xf]
    %v56 = vld [vmem:[%s1 + $0x48] sm:$0xf]
    %v57 = vld [vmem:[%s1 + $0x4c] sm:$0xf]
    %v58 = vld [vmem:[%s1 + $0x50] sm:$0xf]
    %v59 = vld [vmem:[%s1 + $0x54] sm:$0xf]
    %v60 = vld [vmem:[%s1 + $0x58] sm:$0xf]
    %v61 = vld [vmem:[%s1 + $0x5c] sm:$0xf]
    %v62 = vld [vmem:[%s2] sm:$0x1]
    %v64 = vlaneseq
    %v65 = vshrl.u32 %v64, 7
    %v66 = vsub.s32 0, %v65
    %v67 = vrot.slane %v62, %v66
    %v73 = vunpack.c.l.b16 %v34
    %v74 = vunpack.c.h.b16 %v34
    %v75 = vunpack.c.l.b16 %v35
    %v76 = vunpack.c.h.b16 %v35
    %v77 = vunpack.c.l.b16 %v36
    %v78 = vunpack.c.h.b16 %v36
    %v79 = vunpack.c.l.b16 %v37
    %v80 = vunpack.c.h.b16 %v37
    %v81 = vpack.c.b16 %v75, %v73
    %v82 = vpack.c.b16 %v76, %v74
    %v83 = vpack.c.b16 %v79, %v77
    %v84 = vpack.c.b16 %v80, %v78
    %v111 = vunpack.c.l.b16 %v38
    %v112 = vunpack.c.l.b16 %v39
    %v113 = vunpack.c.l.b16 %v40
    %v114 = vunpack.c.l.b16 %v41
    %v115 = vunpack.c.l.b16 %v42
    %v116 = vunpack.c.l.b16 %v43
    %v117 = vunpack.c.l.b16 %v44
    %v118 = vunpack.c.l.b16 %v45
    %v119 = vunpack.c.l.b16 %v46
    %v120 = vunpack.c.l.b16 %v47
    %v121 = vunpack.c.l.b16 %v48
    %v122 = vunpack.c.l.b16 %v49
    %v123 = vunpack.c.l.b16 %v50
    %v124 = vunpack.c.l.b16 %v51
    %v125 = vunpack.c.l.b16 %v52
    %v126 = vunpack.c.l.b16 %v53
    %v127 = vunpack.c.l.b16 %v54
    %v128 = vunpack.c.l.b16 %v55
    %v129 = vunpack.c.l.b16 %v56
    %v130 = vunpack.c.l.b16 %v57
    %v131 = vunpack.c.l.b16 %v58
    %v132 = vunpack.c.l.b16 %v59
    %v133 = vunpack.c.l.b16 %v60
    %v134 = vunpack.c.l.b16 %v61
    %v135 = vpack.c.b16 %v112, %v111
    %v136 = vpack.c.b16 %v114, %v113
    %v137 = vpack.c.b16 %v116, %v115
    %v138 = vpack.c.b16 %v118, %v117
    %v139 = vpack.c.b16 %v120, %v119
    %v140 = vpack.c.b16 %v122, %v121
    %v141 = vpack.c.b16 %v124, %v123
    %v142 = vpack.c.b16 %v126, %v125
    %v143 = vpack.c.b16 %v128, %v127
    %v144 = vpack.c.b16 %v130, %v129
    %v145 = vpack.c.b16 %v132, %v131
    %v146 = vpack.c.b16 %v134, %v133
    %vm159 = vcmask 523264
    %v161 = vsel %vm159, %v82, 0
    %v164 = vsel %vm159, %v84, 0
    %166 = vmatprep.subr.bf16.mxu0 0
    %167 = vmatpush1.bf16.msra.mxu0 %v135
    %168 = vmatprep.subr.bf16.mxu0 0
    %169 = vmatpush1.bf16.msra.mxu0 %v136
    %170 = vmatprep.subr.bf16.mxu0 0
    %171 = vmatpush1.bf16.msra.mxu0 %v137
    %172 = vmatprep.subr.bf16.mxu0 0
    %173 = vmatpush1.bf16.msra.mxu0 %v138
    %174 = vmatprep.subr.bf16.mxu0 0
    %175 = vmatpush1.bf16.msra.mxu0 %v139
    %176 = vmatprep.subr.bf16.mxu0 0
    %177 = vmatpush1.bf16.msra.mxu0 %v140
    %178 = vmatprep.subr.bf16.mxu0 0
    %179 = vmatpush1.bf16.msra.mxu0 %v141
    %180 = vmatprep.subr.bf16.mxu0 0
    %181 = vmatpush1.bf16.msra.mxu0 %v142
    %182 = vmatprep.subr.bf16.mxu0 0
    %183 = vmatpush1.bf16.msra.mxu0 %v143
    %184 = vmatprep.subr.bf16.mxu0 0
    %185 = vmatpush1.bf16.msra.mxu0 %v144
    %186 = vmatprep.subr.bf16.mxu0 0
    %187 = vmatpush1.bf16.msra.mxu0 %v145
    %188 = vmatprep.subr.bf16.mxu0 0
    %189 = vmatpush1.bf16.msra.mxu0 %v146
    %190 = vmatprep.subr.bf16.mxu0 0
    %191 = vmatpush1.bf16.msra.mxu0 0
    %192 = vmatprep.subr.bf16.mxu0 0
    %193 = vmatpush1.bf16.msra.mxu0 0
    %194 = vmatprep.subr.bf16.mxu0 0
    %195 = vmatpush1.bf16.msra.mxu0 0
    %196 = vmatprep.subr.bf16.mxu0 0
    %197 = vmatpush1.bf16.msra.mxu0 0
    %198 = vmatprep.mubr.bf16.mxu0 %v161
    %199 = vmatmul.mubr.bf16.gmra.mrb[0].mxu0 %v81
    %v200 = vpop.f32.mrb[0].mxu0
    %v201 = vadd.f32 %v67, %v200
    %v202 = vpop.f32.mrb[0].mxu0
    %v203 = vpop.f32.mrb[0].mxu0
    %v204 = vadd.f32 %v67, %v203
    %v205 = vpop.f32.mrb[0].mxu0
    %206 = vmatprep.mubr.bf16.mxu0 %v164
    %207 = vmatmul.mubr.bf16.gmra.mrb[0].mxu0 %v83
    %v208 = vpop.f32.mrb[0].mxu0
    %v209 = vadd.f32 %v67, %v208
    %v210 = vpop.f32.mrb[0].mxu0
    %v211 = vpop.f32.mrb[0].mxu0
    %v212 = vadd.f32 %v67, %v211
    %v213 = vpop.f32.mrb[0].mxu0
    %214 = vdwg.mxu0
    %v215 = vmax.f32 %v201, 0.0
    %v216 = vmax.f32 %v204, 0.0
    %v217 = vmax.f32 %v209, 0.0
    %v218 = vmax.f32 %v212, 0.0
    %v219 = vmax.f32 %v215, %v216
    %221 = vrot.lane.b32.xlu0 %v219, 64
    %v222 = vpop.permute.xlu0 %221
    %v224 = vmax.f32 %v219, %v222
    %v225 = vpack.c.bf16 %v224, %v224
    %v226 = vmax.f32 %v217, %v218
    %228 = vrot.lane.b32.xlu0 %v226, 64
    %v229 = vpop.permute.xlu0 %228
    %v231 = vmax.f32 %v226, %v229
    %v232 = vpack.c.bf16 %v231, %v231
    %v234 = vrot.slane %v232, 7
    %vm235 = vcmask 1040384
    %v238 = vsel %vm235, 0, %v234
    %v240 = vrot.slane %v225, 1
    %vm241 = vcmask 1042432
    %v243 = vsel %vm241, %v240, 0
    %244 = vrot.lane.b32.xlu0 %v225, 64
    %v245 = vpop.permute.xlu0 %244
    %v247 = vsel %vm159, %v238, %v245
    %248 = vrot.lane.b32.xlu0 %v232, 64
    %v249 = vpop.permute.xlu0 %248
    %v252 = vsel %vm159, %v225, %v249
    %v255 = vrot.slane %v252, 4
    %v256 = vrot.slane %v243, 4
    %vm257 = vcmask 1043456
    %v259 = vsel %vm257, %v247, %v255
    %v263 = vsel %vm257, %v232, %v256
    %v264 = vld [vmem:[%s3] sm:$0xf]
    %v265 = vld [vmem:[%s3 + $0x4] sm:$0xf]
    %v266 = vld [vmem:[%s3 + $0x8] sm:$0xf]
    %v267 = vld [vmem:[%s3 + $0xc] sm:$0xf]
    %v268 = vld [vmem:[%s3 + $0x10] sm:$0xf]
    %v269 = vld [vmem:[%s3 + $0x14] sm:$0xf]
    %v270 = vld [vmem:[%s3 + $0x18] sm:$0xf]
    %v271 = vld [vmem:[%s3 + $0x1c] sm:$0xf]
    %v272 = vld [vmem:[%s3 + $0x20] sm:$0xf]
    %v273 = vld [vmem:[%s3 + $0x24] sm:$0xf]
    %v274 = vld [vmem:[%s3 + $0x28] sm:$0xf]
    %v275 = vld [vmem:[%s3 + $0x2c] sm:$0xf]
    %v276 = vld [vmem:[%s3 + $0x30] sm:$0xf]
    %v277 = vld [vmem:[%s3 + $0x34] sm:$0xf]
    %v278 = vld [vmem:[%s3 + $0x38] sm:$0xf]
    %v279 = vld [vmem:[%s3 + $0x3c] sm:$0xf]
    %v280 = vld [vmem:[%s3 + $0x40] sm:$0xf]
    %v281 = vld [vmem:[%s3 + $0x44] sm:$0xf]
    %v282 = vld [vmem:[%s3 + $0x48] sm:$0xf]
    %v283 = vld [vmem:[%s3 + $0x4c] sm:$0xf]
    %v284 = vld [vmem:[%s3 + $0x50] sm:$0xf]
    %v285 = vld [vmem:[%s3 + $0x54] sm:$0xf]
    %v286 = vld [vmem:[%s3 + $0x58] sm:$0xf]
    %v287 = vld [vmem:[%s3 + $0x5c] sm:$0xf]
    %v288 = vld [vmem:[%s4] sm:$0x1]
    %v290 = vlaneseq
    %v291 = vshrl.u32 %v290, 7
    %v292 = vsub.s32 0, %v291
    %v293 = vrot.slane %v288, %v292
    %v319 = vunpack.c.l.b16 %v264
    %v320 = vunpack.c.l.b16 %v265
    %v321 = vunpack.c.l.b16 %v266
    %v322 = vunpack.c.l.b16 %v267
    %v323 = vunpack.c.l.b16 %v268
    %v324 = vunpack.c.l.b16 %v269
    %v325 = vunpack.c.l.b16 %v270
    %v326 = vunpack.c.l.b16 %v271
    %v327 = vunpack.c.l.b16 %v272
    %v328 = vunpack.c.l.b16 %v273
    %v329 = vunpack.c.l.b16 %v274
    %v330 = vunpack.c.l.b16 %v275
    %v331 = vunpack.c.l.b16 %v276
    %v332 = vunpack.c.l.b16 %v277
    %v333 = vunpack.c.l.b16 %v278
    %v334 = vunpack.c.l.b16 %v279
    %v335 = vunpack.c.l.b16 %v280
    %v336 = vunpack.c.l.b16 %v281
    %v337 = vunpack.c.l.b16 %v282
    %v338 = vunpack.c.l.b16 %v283
    %v339 = vunpack.c.l.b16 %v284
    %v340 = vunpack.c.l.b16 %v285
    %v341 = vunpack.c.l.b16 %v286
    %v342 = vunpack.c.l.b16 %v287
    %v343 = vpack.c.b16 %v320, %v319
    %v344 = vpack.c.b16 %v322, %v321
    %v345 = vpack.c.b16 %v324, %v323
    %v346 = vpack.c.b16 %v326, %v325
    %v347 = vpack.c.b16 %v328, %v327
    %v348 = vpack.c.b16 %v330, %v329
    %v349 = vpack.c.b16 %v332, %v331
    %v350 = vpack.c.b16 %v334, %v333
    %v351 = vpack.c.b16 %v336, %v335
    %v352 = vpack.c.b16 %v338, %v337
    %v353 = vpack.c.b16 %v340, %v339
    %v354 = vpack.c.b16 %v342, %v341
    %v367 = vsel %vm159, %v263, 0
    %369 = vmatprep.subr.bf16.mxu0 0
    %370 = vmatpush1.bf16.msra.mxu0 %v343
    %371 = vmatprep.subr.bf16.mxu0 0
    %372 = vmatpush1.bf16.msra.mxu0 %v344
    %373 = vmatprep.subr.bf16.mxu0 0
    %374 = vmatpush1.bf16.msra.mxu0 %v345
    %375 = vmatprep.subr.bf16.mxu0 0
    %376 = vmatpush1.bf16.msra.mxu0 %v346
    %377 = vmatprep.subr.bf16.mxu0 0
    %378 = vmatpush1.bf16.msra.mxu0 %v347
    %379 = vmatprep.subr.bf16.mxu0 0
    %380 = vmatpush1.bf16.msra.mxu0 %v348
    %381 = vmatprep.subr.bf16.mxu0 0
    %382 = vmatpush1.bf16.msra.mxu0 %v349
    %383 = vmatprep.subr.bf16.mxu0 0
    %384 = vmatpush1.bf16.msra.mxu0 %v350
    %385 = vmatprep.subr.bf16.mxu0 0
    %386 = vmatpush1.bf16.msra.mxu0 %v351
    %387 = vmatprep.subr.bf16.mxu0 0
    %388 = vmatpush1.bf16.msra.mxu0 %v352
    %389 = vmatprep.subr.bf16.mxu0 0
    %390 = vmatpush1.bf16.msra.mxu0 %v353
    %391 = vmatprep.subr.bf16.mxu0 0
    %392 = vmatpush1.bf16.msra.mxu0 %v354
    %393 = vmatprep.subr.bf16.mxu0 0
    %394 = vmatpush1.bf16.msra.mxu0 0
    %395 = vmatprep.subr.bf16.mxu0 0
    %396 = vmatpush1.bf16.msra.mxu0 0
    %397 = vmatprep.subr.bf16.mxu0 0
    %398 = vmatpush1.bf16.msra.mxu0 0
    %399 = vmatprep.subr.bf16.mxu0 0
    %400 = vmatpush1.bf16.msra.mxu0 0
    %401 = vmatprep.mubr.bf16.mxu0 %v367
    %402 = vmatmul.mubr.bf16.gmra.mrb[0].mxu0 %v259
    %v403 = vpop.f32.mrb[0].mxu0
    %v404 = vadd.f32 %v293, %v403
    %v405 = vpop.f32.mrb[0].mxu0
    %v406 = vpop.f32.mrb[0].mxu0
    %v407 = vadd.f32 %v293, %v406
    %v408 = vpop.f32.mrb[0].mxu0
    %409 = vdwg.mxu0
    %v410 = vmax.f32 %v404, 0.0
    %v411 = vmax.f32 %v407, 0.0
    %v412 = vmax.f32 %v410, %v411
    %414 = vrot.lane.b32.xlu0 %v412, 64
    %v415 = vpop.permute.xlu0 %414
    %v417 = vmax.f32 %v412, %v415
    %v419 = vrot.slane %v417, 2
    %420 = vrot.lane.b32.xlu0 %v419, 64
    %v421 = vpop.permute.xlu0 %420
    %v423 = vrot.slane %v417, 4
    %v425 = vrot.slane %v417, 6
    %426 = vrot.lane.b32.xlu0 %v425, 64
    %v427 = vpop.permute.xlu0 %426
    %v429 = vsel %vm159, %v417, %v421
    %v430 = vsel %vm159, %v423, %v427
    %v431 = vpack.c.bf16 %v429, %v429
    %v432 = vpack.c.bf16 %v430, %v430
    %v433 = vld [vmem:[%s5] sm:$0xf]
    %v434 = vld [vmem:[%s5 + $0x4] sm:$0xf]
    %v435 = vld [vmem:[%s5 + $0x8] sm:$0xf]
    %v436 = vld [vmem:[%s5 + $0xc] sm:$0xf]
    %v437 = vld [vmem:[%s5 + $0x10] sm:$0xf]
    %v438 = vld [vmem:[%s5 + $0x14] sm:$0xf]
    %v439 = vld [vmem:[%s5 + $0x18] sm:$0xf]
    %v440 = vld [vmem:[%s5 + $0x1c] sm:$0xf]
    %v441 = vld [vmem:[%s5 + $0x20] sm:$0xf]
    %v442 = vld [vmem:[%s5 + $0x24] sm:$0xf]
    %v443 = vld [vmem:[%s5 + $0x28] sm:$0xf]
    %v444 = vld [vmem:[%s5 + $0x2c] sm:$0xf]
    %v445 = vld [vmem:[%s5 + $0x30] sm:$0xf]
    %v446 = vld [vmem:[%s5 + $0x34] sm:$0xf]
    %v447 = vld [vmem:[%s5 + $0x38] sm:$0xf]
    %v448 = vld [vmem:[%s5 + $0x3c] sm:$0xf]
    %v449 = vld [vmem:[%s5 + $0x40] sm:$0xf]
    %v450 = vld [vmem:[%s5 + $0x44] sm:$0xf]
    %v451 = vld [vmem:[%s5 + $0x48] sm:$0xf]
    %v452 = vld [vmem:[%s5 + $0x4c] sm:$0xf]
    %v453 = vld [vmem:[%s5 + $0x50] sm:$0xf]
    %v454 = vld [vmem:[%s5 + $0x54] sm:$0xf]
    %v455 = vld [vmem:[%s5 + $0x58] sm:$0xf]
    %v456 = vld [vmem:[%s5 + $0x5c] sm:$0xf]
    %v457 = vld [vmem:[%s5 + $0x60] sm:$0xf]
    %v458 = vld [vmem:[%s5 + $0x64] sm:$0xf]
    %v459 = vld [vmem:[%s5 + $0x68] sm:$0xf]
    %v460 = vld [vmem:[%s5 + $0x6c] sm:$0xf]
    %v461 = vld [vmem:[%s5 + $0x70] sm:$0xf]
    %v462 = vld [vmem:[%s5 + $0x74] sm:$0xf]
    %v463 = vld [vmem:[%s5 + $0x78] sm:$0xf]
    %v464 = vld [vmem:[%s5 + $0x7c] sm:$0xf]
    %v465 = vld [vmem:[%s6] sm:$0x1]
    %v467 = vlaneseq
    %v468 = vshrl.u32 %v467, 7
    %v469 = vsub.s32 0, %v468
    %v470 = vrot.slane %v465, %v469
    %v504 = vunpack.c.l.b16 %v433
    %v505 = vunpack.c.l.b16 %v434
    %v506 = vunpack.c.l.b16 %v435
    %v507 = vunpack.c.l.b16 %v436
    %v508 = vunpack.c.l.b16 %v437
    %v509 = vunpack.c.l.b16 %v438
    %v510 = vunpack.c.l.b16 %v439
    %v511 = vunpack.c.l.b16 %v440
    %v512 = vunpack.c.l.b16 %v441
    %v513 = vunpack.c.l.b16 %v442
    %v514 = vunpack.c.l.b16 %v443
    %v515 = vunpack.c.l.b16 %v444
    %v516 = vunpack.c.l.b16 %v445
    %v517 = vunpack.c.l.b16 %v446
    %v518 = vunpack.c.l.b16 %v447
    %v519 = vunpack.c.l.b16 %v448
    %v520 = vunpack.c.l.b16 %v449
    %v521 = vunpack.c.l.b16 %v450
    %v522 = vunpack.c.l.b16 %v451
    %v523 = vunpack.c.l.b16 %v452
    %v524 = vunpack.c.l.b16 %v453
    %v525 = vunpack.c.l.b16 %v454
    %v526 = vunpack.c.l.b16 %v455
    %v527 = vunpack.c.l.b16 %v456
    %v528 = vunpack.c.l.b16 %v457
    %v529 = vunpack.c.l.b16 %v458
    %v530 = vunpack.c.l.b16 %v459
    %v531 = vunpack.c.l.b16 %v460
    %v532 = vunpack.c.l.b16 %v461
    %v533 = vunpack.c.l.b16 %v462
    %v534 = vunpack.c.l.b16 %v463
    %v535 = vunpack.c.l.b16 %v464
    %v536 = vpack.c.b16 %v505, %v504
    %v537 = vpack.c.b16 %v507, %v506
    %v538 = vpack.c.b16 %v509, %v508
    %v539 = vpack.c.b16 %v511, %v510
    %v540 = vpack.c.b16 %v513, %v512
    %v541 = vpack.c.b16 %v515, %v514
    %v542 = vpack.c.b16 %v517, %v516
    %v543 = vpack.c.b16 %v519, %v518
    %v544 = vpack.c.b16 %v521, %v520
    %v545 = vpack.c.b16 %v523, %v522
    %v546 = vpack.c.b16 %v525, %v524
    %v547 = vpack.c.b16 %v527, %v526
    %v548 = vpack.c.b16 %v529, %v528
    %v549 = vpack.c.b16 %v531, %v530
    %v550 = vpack.c.b16 %v533, %v532
    %v551 = vpack.c.b16 %v535, %v534
    %568 = vmatprep.subr.bf16.mxu0 0
    %569 = vmatpush1.bf16.msra.mxu0 %v536
    %570 = vmatprep.subr.bf16.mxu0 0
    %571 = vmatpush1.bf16.msra.mxu0 %v537
    %572 = vmatprep.subr.bf16.mxu0 0
    %573 = vmatpush1.bf16.msra.mxu0 %v538
    %574 = vmatprep.subr.bf16.mxu0 0
    %575 = vmatpush1.bf16.msra.mxu0 %v539
    %576 = vmatprep.subr.bf16.mxu0 0
    %577 = vmatpush1.bf16.msra.mxu0 %v540
    %578 = vmatprep.subr.bf16.mxu0 0
    %579 = vmatpush1.bf16.msra.mxu0 %v541
    %580 = vmatprep.subr.bf16.mxu0 0
    %581 = vmatpush1.bf16.msra.mxu0 %v542
    %582 = vmatprep.subr.bf16.mxu0 0
    %583 = vmatpush1.bf16.msra.mxu0 %v543
    %584 = vmatprep.subr.bf16.mxu0 0
    %585 = vmatpush1.bf16.msra.mxu0 %v544
    %586 = vmatprep.subr.bf16.mxu0 0
    %587 = vmatpush1.bf16.msra.mxu0 %v545
    %588 = vmatprep.subr.bf16.mxu0 0
    %589 = vmatpush1.bf16.msra.mxu0 %v546
    %590 = vmatprep.subr.bf16.mxu0 0
    %591 = vmatpush1.bf16.msra.mxu0 %v547
    %592 = vmatprep.subr.bf16.mxu0 0
    %593 = vmatpush1.bf16.msra.mxu0 %v548
    %594 = vmatprep.subr.bf16.mxu0 0
    %595 = vmatpush1.bf16.msra.mxu0 %v549
    %596 = vmatprep.subr.bf16.mxu0 0
    %597 = vmatpush1.bf16.msra.mxu0 %v550
    %598 = vmatprep.subr.bf16.mxu0 0
    %599 = vmatpush1.bf16.msra.mxu0 %v551
    %600 = vmatprep.mubr.bf16.mxu0 %v432
    %601 = vmatmul.mubr.bf16.gmra.mrb[0].mxu0 %v431
    %v602 = vpop.f32.mrb[0].mxu0
    %v603 = vadd.f32 %v470, %v602
    %v604 = vpop.f32.mrb[0].mxu0
    %v605 = vpop.f32.mrb[0].mxu0
    %v606 = vpop.f32.mrb[0].mxu0
    %607 = vdwg.mxu0
    %v608 = vmax.f32 %v603, 0.0
    %v609 = vpack.c.bf16 %v608, %v608
    %v610 = vld [vmem:[%s7] sm:$0xf]
    %v611 = vld [vmem:[%s7 + $0x4] sm:$0xf]
    %v612 = vld [vmem:[%s7 + $0x8] sm:$0xf]
    %v613 = vld [vmem:[%s7 + $0xc] sm:$0xf]
    %v614 = vld [vmem:[%s7 + $0x10] sm:$0xf]
    %v615 = vld [vmem:[%s7 + $0x14] sm:$0xf]
    %v616 = vld [vmem:[%s7 + $0x18] sm:$0xf]
    %v617 = vld [vmem:[%s7 + $0x1c] sm:$0xf]
    %v618 = vld [vmem:[%s7 + $0x20] sm:$0xf]
    %v619 = vld [vmem:[%s7 + $0x24] sm:$0xf]
    %v620 = vld [vmem:[%s7 + $0x28] sm:$0xf]
    %v621 = vld [vmem:[%s7 + $0x2c] sm:$0xf]
    %v622 = vld [vmem:[%s7 + $0x30] sm:$0xf]
    %v623 = vld [vmem:[%s7 + $0x34] sm:$0xf]
    %v624 = vld [vmem:[%s7 + $0x38] sm:$0xf]
    %v625 = vld [vmem:[%s7 + $0x3c] sm:$0xf]
    %v626 = vld [vmem:[%s8] sm:$0x1]
    %v628 = vlaneseq
    %v629 = vshrl.u32 %v628, 7
    %v630 = vsub.s32 0, %v629
    %v631 = vrot.slane %v626, %v630
    %v649 = vunpack.c.l.b16 %v610
    %v650 = vunpack.c.l.b16 %v611
    %v651 = vunpack.c.l.b16 %v612
    %v652 = vunpack.c.l.b16 %v613
    %v653 = vunpack.c.l.b16 %v614
    %v654 = vunpack.c.l.b16 %v615
    %v655 = vunpack.c.l.b16 %v616
    %v656 = vunpack.c.l.b16 %v617
    %v657 = vunpack.c.l.b16 %v618
    %v658 = vunpack.c.l.b16 %v619
    %v659 = vunpack.c.l.b16 %v620
    %v660 = vunpack.c.l.b16 %v621
    %v661 = vunpack.c.l.b16 %v622
    %v662 = vunpack.c.l.b16 %v623
    %v663 = vunpack.c.l.b16 %v624
    %v664 = vunpack.c.l.b16 %v625
    %v665 = vpack.c.b16 %v650, %v649
    %v666 = vpack.c.b16 %v652, %v651
    %v667 = vpack.c.b16 %v654, %v653
    %v668 = vpack.c.b16 %v656, %v655
    %v669 = vpack.c.b16 %v658, %v657
    %v670 = vpack.c.b16 %v660, %v659
    %v671 = vpack.c.b16 %v662, %v661
    %v672 = vpack.c.b16 %v664, %v663
    %681 = vmatprep.subr.bf16.mxu0 0
    %682 = vmatpush1.bf16.msra.mxu0 %v665
    %683 = vmatprep.subr.bf16.mxu0 0
    %684 = vmatpush1.bf16.msra.mxu0 %v666
    %685 = vmatprep.subr.bf16.mxu0 0
    %686 = vmatpush1.bf16.msra.mxu0 %v667
    %687 = vmatprep.subr.bf16.mxu0 0
    %688 = vmatpush1.bf16.msra.mxu0 %v668
    %689 = vmatprep.subr.bf16.mxu0 0
    %690 = vmatpush1.bf16.msra.mxu0 %v669
    %691 = vmatprep.subr.bf16.mxu0 0
    %692 = vmatpush1.bf16.msra.mxu0 %v670
    %693 = vmatprep.subr.bf16.mxu0 0
    %694 = vmatpush1.bf16.msra.mxu0 %v671
    %695 = vmatprep.subr.bf16.mxu0 0
    %696 = vmatpush1.bf16.msra.mxu0 %v672
    %697 = vmatprep.subr.bf16.mxu0 0
    %698 = vmatpush1.bf16.msra.mxu0 0
    %699 = vmatprep.subr.bf16.mxu0 0
    %700 = vmatpush1.bf16.msra.mxu0 0
    %701 = vmatprep.subr.bf16.mxu0 0
    %702 = vmatpush1.bf16.msra.mxu0 0
    %703 = vmatprep.subr.bf16.mxu0 0
    %704 = vmatpush1.bf16.msra.mxu0 0
    %705 = vmatprep.subr.bf16.mxu0 0
    %706 = vmatpush1.bf16.msra.mxu0 0
    %707 = vmatprep.subr.bf16.mxu0 0
    %708 = vmatpush1.bf16.msra.mxu0 0
    %709 = vmatprep.subr.bf16.mxu0 0
    %710 = vmatpush1.bf16.msra.mxu0 0
    %711 = vmatprep.subr.bf16.mxu0 0
    %712 = vmatpush1.bf16.msra.mxu0 0
    %713 = vmatprep.mubr.bf16.mxu0 0
    %714 = vmatmul.mubr.bf16.gmra.mrb[0].mxu0 %v609
    %v715 = vpop.f32.mrb[0].mxu0
    %v716 = vadd.f32 %v631, %v715
    %v717 = vpop.f32.mrb[0].mxu0
    %v718 = vpop.f32.mrb[0].mxu0
    %v719 = vpop.f32.mrb[0].mxu0
    %720 = vdwg.mxu0
    %721 = vst [vmem:[#allocation2] sm:$0x3] %v716
    // Predicated region
    $region38: #{cnn_forward.1} parent=1 // pred_check
      _
    $region39: #{cnn_forward.1} parent=1 // pred_check_branch
      %723 = sbr.rel (0) target = $region41
    $region40: #{cnn_forward.1} parent=1 // pred_region
      %s725 = ssub.s32 32, 32
      %726 = vsyncadd [#allocation3], %s725
      %s728 = sshll.u32 [#allocation2], 4
      %s729 = int_to_ptr.vmem [resolvable:$true] %s728
      %731 = dma.vmem_to_hbm [thread:$0]  %s729, 32, %s9, [#allocation3]
    $region41: #{cnn_forward.1} parent=1 // pred_fallthru
      _
    // Predicated region
    $region42: #{cnn_forward.1} parent=1 // pred_check
      _
    $region43: #{cnn_forward.1} parent=1 // pred_check_branch
      %733 = sbr.rel (0) target = $region45
    $region44: #{cnn_forward.1} parent=1 // pred_region
      %734 = dma.done [#allocation3], 32
    $region45: #{cnn_forward.1} parent=1 // pred_fallthru
      _
    %735 = vsyncpa [#allocation3], 1

</llo_original>
